<compile_context>
chip_gen: v6e
topology: v6e:2x2x1
jax: 0.10.0
libtpu: 0.0.40
codegen_flags: <defaults>
</compile_context>

<pallas_src>
import jax
import jax.numpy as jnp
from jax.experimental import pallas as pl
from jax.experimental.pallas import tpu as pltpu

_MIB = 1024 * 1024


def _round_up(x, m):
    return (x + m - 1) // m * m


# ---------------------------------------------------------------------------
# Kernels
# ---------------------------------------------------------------------------

def ffn_full_kernel(x_ref, w1_ref, b1_ref, w2_ref, b2_ref, o_ref):
    """Whole d_ff resident in VMEM: fused fc1 -> relu -> fc2 per token tile."""
    h = jnp.dot(x_ref[...], w1_ref[...], preferred_element_type=jnp.float32)
    h = jnp.maximum(h + b1_ref[...], 0.0)          # f32 epilogue (v5e-safe)
    # TODO(synk): train-mode dropout mask would be applied to h here.
    h = h.astype(w2_ref.dtype)                     # bf16 for the MXU if bf16 weights
    y = jnp.dot(h, w2_ref[...], preferred_element_type=jnp.float32)
    o_ref[...] = (y + b2_ref[...]).astype(o_ref.dtype)


def ffn_tiled_kernel_scratch(x_ref, w1_ref, b1_ref, w2_ref, b2_ref, o_ref, acc_ref):
    """d_ff tiled along grid axis j (reduction, last); f32 accumulator in scratch."""
    j = pl.program_id(1)

    @pl.when(j == 0)
    def _init():
        # Fold the fc2 bias into the accumulator init (once per token tile).
        acc_ref[...] = jnp.broadcast_to(
            b2_ref[...].astype(jnp.float32), acc_ref.shape)

    h = jnp.dot(x_ref[...], w1_ref[...], preferred_element_type=jnp.float32)
    h = jnp.maximum(h + b1_ref[...], 0.0)
    h = h.astype(w2_ref.dtype)
    acc_ref[...] += jnp.dot(h, w2_ref[...], preferred_element_type=jnp.float32)

    @pl.when(j == pl.num_programs(1) - 1)
    def _finalize():
        o_ref[...] = acc_ref[...].astype(o_ref.dtype)


def ffn_tiled_kernel_inplace(x_ref, w1_ref, b1_ref, w2_ref, b2_ref, o_ref):
    """d_ff tiled; f32 output block doubles as the accumulator (no scratch)."""
    j = pl.program_id(1)

    @pl.when(j == 0)
    def _init():
        o_ref[...] = jnp.broadcast_to(b2_ref[...].astype(o_ref.dtype), o_ref.shape)

    h = jnp.dot(x_ref[...], w1_ref[...], preferred_element_type=jnp.float32)
    h = jnp.maximum(h + b1_ref[...], 0.0)
    h = h.astype(w2_ref.dtype)
    o_ref[...] += jnp.dot(h, w2_ref[...], preferred_element_type=jnp.float32)


# ---------------------------------------------------------------------------
# VMEM sizing helpers
# ---------------------------------------------------------------------------

def _vmem_capacity_bytes():
    cap = 64 * _MIB  # conservative default (v7x per-TC VMEM)
    try:
        info = pltpu.get_tpu_info()
        cap = int(getattr(info, "vmem_capacity_bytes", cap) or cap)
    except Exception:
        pass
    return cap


def _full_path_bytes(tm, d_model, d_ff, xb, wb, ob):
    return (2 * tm * d_model * xb            # x tile (double-buffered)
            + 2 * d_model * d_ff * wb        # W1 (resident; budget 2 bufs to be safe)
            + 2 * d_ff * d_model * wb        # W2
            + 2 * tm * d_model * ob          # out tile
            + 2 * d_ff * 4 + 2 * d_model * 4 # biases (f32)
            + tm * d_ff * 4)                 # h temporary (f32)


def _tiled_path_bytes(tm, tf, d_model, xb, wb, ob, use_scratch):
    b = (2 * tm * d_model * xb
         + 2 * d_model * tf * wb
         + 2 * tf * d_model * wb
         + 2 * tm * d_model * ob
         + 2 * tf * 4 + 2 * d_model * 4
         + tm * tf * 4)
    if use_scratch:
        b += tm * d_model * 4
    return b


# ---------------------------------------------------------------------------
# Wrapper
# ---------------------------------------------------------------------------

def positionwise_ffn(x, w1, b1, w2, b2, *, tm=None, tf=None, compute_dtype=None):
    """PositionwiseFeedForward forward pass (eval mode: dropout == identity).

    x: (batch, seq, d_model)
    w1: (d_model, d_ff)  == fc1.weight.T;  b1: (d_ff,)
    w2: (d_ff, d_model)  == fc2.weight.T;  b2: (d_model,)
    """
    batch, seq, d_model = x.shape
    d_ff = w1.shape[1]
    out_dtype = x.dtype
    M = batch * seq

    x2d = x.reshape(M, d_model)

    # Default to bf16 compute when the weights are already bf16 (weight streaming
    # dominates HBM traffic here); otherwise keep dtypes as given.
    if compute_dtype is None and w1.dtype == jnp.bfloat16 and w2.dtype == jnp.bfloat16:
        compute_dtype = jnp.bfloat16
    if compute_dtype is not None:
        x2d = x2d.astype(compute_dtype)
        w1 = w1.astype(compute_dtype)
        w2 = w2.astype(compute_dtype)
    # Biases stay f32 and are added on the f32 accumulator / epilogue.
    b1_2d = b1.reshape(1, d_ff).astype(jnp.float32)
    b2_2d = b2.reshape(1, d_model).astype(jnp.float32)

    xb = jnp.dtype(x2d.dtype).itemsize
    wb = jnp.dtype(w1.dtype).itemsize
    ob = jnp.dtype(out_dtype).itemsize

    # Generation-aware VMEM budget (v5e/v6e: 128 MiB, v7x: 64 MiB per TC).
    cap = _vmem_capacity_bytes()
    budget = max(cap - 16 * _MIB, 32 * _MIB)

    # Token tile: large enough to amortize weight streaming (arithmetic intensity
    # ~tm FLOP per weight byte), clamped to the (padded) token count.
    tm_target = tm if tm is not None else 512
    tm_eff = min(_round_up(tm_target, 16), _round_up(M, 16))

    # --- Path 1: whole W1/W2 resident in VMEM (weights DMA'd once). ------------
    use_full = (tf is None) or (tf >= d_ff)
    if use_full and _full_path_bytes(tm_eff, d_model, d_ff, xb, wb, ob) > budget:
        use_full = False

    if use_full:
        M_pad = _round_up(M, tm_eff)
        if M_pad != M:
            x2d = jnp.pad(x2d, ((0, M_pad - M), (0, 0)))
        needed = _full_path_bytes(tm_eff, d_model, d_ff, xb, wb, ob)
        vmem_limit = int(min(cap - 8 * _MIB, max(needed + 16 * _MIB, 32 * _MIB)))

        out2d = pl.pallas_call(
            ffn_full_kernel,
            out_shape=jax.ShapeDtypeStruct((M_pad, d_model), out_dtype),
            grid_spec=pltpu.PrefetchScalarGridSpec(
                num_scalar_prefetch=0,
                grid=(M_pad // tm_eff,),
                in_specs=[
                    pl.BlockSpec((tm_eff, d_model), lambda i: (i, 0)),   # x tile
                    pl.BlockSpec((d_model, d_ff), lambda i: (0, 0)),     # W1 (resident)
                    pl.BlockSpec((1, d_ff), lambda i: (0, 0)),           # b1
                    pl.BlockSpec((d_ff, d_model), lambda i: (0, 0)),     # W2 (resident)
                    pl.BlockSpec((1, d_model), lambda i: (0, 0)),        # b2
                ],
                out_specs=pl.BlockSpec((tm_eff, d_model), lambda i: (i, 0)),
            ),
            compiler_params=pltpu.CompilerParams(
                dimension_semantics=("parallel",),
                vmem_limit_bytes=vmem_limit,
            ),
        )(x2d, w1, b1_2d, w2, b2_2d)
        return out2d[:M].reshape(batch, seq, d_model)

    # --- Path 2: d_ff tiled (weights streamed per token tile). -----------------
    use_scratch = out_dtype != jnp.float32
    tf_target = tf if tf is not None else (1024 if budget >= 96 * _MIB else 512)
    # 256-aligned feed/contract tiles avoid partial MXU passes on v6e/v7x
    # (and are also 128-aligned, so fine on v5e).
    tf_eff = _round_up(min(max(tf_target, 256), _round_up(d_ff, 256)), 256)
    while (_tiled_path_bytes(tm_eff, tf_eff, d_model, xb, wb, ob, use_scratch) > budget
           and tf_eff > 256):
        tf_eff = _round_up(tf_eff // 2, 256)
    while (_tiled_path_bytes(tm_eff, tf_eff, d_model, xb, wb, ob, use_scratch) > budget
           and tm_eff > 16):
        tm_eff = max(16, _round_up(tm_eff // 2, 16))

    M_pad = _round_up(M, tm_eff)
    if M_pad != M:
        x2d = jnp.pad(x2d, ((0, M_pad - M), (0, 0)))

    # Zero-padding d_ff is exact: relu(0 + 0) = 0 and the W2 pad rows are zero.
    d_ff_pad = _round_up(d_ff, tf_eff)
    if d_ff_pad != d_ff:
        pad_f = d_ff_pad - d_ff
        w1 = jnp.pad(w1, ((0, 0), (0, pad_f)))
        b1_2d = jnp.pad(b1_2d, ((0, 0), (0, pad_f)))
        w2 = jnp.pad(w2, ((0, pad_f), (0, 0)))

    grid = (M_pad // tm_eff, d_ff_pad // tf_eff)
    needed = _tiled_path_bytes(tm_eff, tf_eff, d_model, xb, wb, ob, use_scratch)
    vmem_limit = int(min(cap - 8 * _MIB, max(needed + 16 * _MIB, 32 * _MIB)))

    kernel = ffn_tiled_kernel_scratch if use_scratch else ffn_tiled_kernel_inplace
    scratch_shapes = ([pltpu.VMEM((tm_eff, d_model), jnp.float32)]
                      if use_scratch else [])

    out2d = pl.pallas_call(
        kernel,
        out_shape=jax.ShapeDtypeStruct((M_pad, d_model), out_dtype),
        grid_spec=pltpu.PrefetchScalarGridSpec(
            num_scalar_prefetch=0,
            grid=grid,
            in_specs=[
                pl.BlockSpec((tm_eff, d_model), lambda i, j: (i, 0)),   # x (resident over j)
                pl.BlockSpec((d_model, tf_eff), lambda i, j: (0, j)),   # W1 col tile
                pl.BlockSpec((1, tf_eff), lambda i, j: (0, j)),         # b1 tile
                pl.BlockSpec((tf_eff, d_model), lambda i, j: (j, 0)),   # W2 row tile
                pl.BlockSpec((1, d_model), lambda i, j: (0, 0)),        # b2
            ],
            out_specs=pl.BlockSpec((tm_eff, d_model), lambda i, j: (i, 0)),
            scratch_shapes=scratch_shapes,
        ),
        compiler_params=pltpu.CompilerParams(
            dimension_semantics=("parallel", "arbitrary"),
            vmem_limit_bytes=vmem_limit,
        ),
    )(x2d, w1, b1_2d, w2, b2_2d)

    return out2d[:M].reshape(batch, seq, d_model)


def _ref_ffn(x, w1, b1, w2, b2):
    return jnp.maximum(x @ w1 + b1, 0.0) @ w2 + b2


if __name__ == "__main__":
    key = jax.random.PRNGKey(0)
    keys = jax.random.split(key, 10)

    # --- Check 1: small module-consistent shapes -> full-d_ff (weights-resident) path.
    batch, seq, d_model, d_ff = 2, 8, 32, 64
    x = jax.random.normal(keys[0], (batch, seq, d_model), dtype=jnp.float32)
    w1 = jax.random.normal(keys[1], (d_model, d_ff), jnp.float32) / jnp.sqrt(d_model)
    b1 = jax.random.normal(keys[2], (d_ff,), jnp.float32) * 0.01
    w2 = jax.random.normal(keys[3], (d_ff, d_model), jnp.float32) / jnp.sqrt(d_ff)
    b2 = jax.random.normal(keys[4], (d_model,), jnp.float32) * 0.01

    out = jax.block_until_ready(positionwise_ffn(x, w1, b1, w2, b2))
    ref = _ref_ffn(x, w1, b1, w2, b2)
    assert out.shape == (batch, seq, d_model)
    assert jnp.allclose(out, ref, atol=1e-4, rtol=1e-4)

    # --- Check 2: forces the tiled-d_ff path (2 reduction steps, 2 token tiles,
    #              f32 output -> accumulate directly into o_ref, token padding).
    b2_, s2_, dm2, dff2 = 2, 9, 128, 512          # M=18 -> padded to 32 with tm=16
    x_b = jax.random.normal(keys[5], (b2_, s2_, dm2), dtype=jnp.float32)
    w1_b = jax.random.normal(keys[6], (dm2, dff2), jnp.float32) / jnp.sqrt(dm2)
    b1_b = jax.random.normal(keys[7], (dff2,), jnp.float32) * 0.01
    w2_b = jax.random.normal(keys[8], (dff2, dm2), jnp.float32) / jnp.sqrt(dff2)
    b2_b = jax.random.normal(keys[9], (dm2,), jnp.float32) * 0.01

    out_b = jax.block_until_ready(
        positionwise_ffn(x_b, w1_b, b1_b, w2_b, b2_b, tm=16, tf=256)
    )
    ref_b = _ref_ffn(x_b, w1_b, b1_b, w2_b, b2_b)
    assert out_b.shape == (b2_, s2_, dm2)
    assert jnp.allclose(out_b, ref_b, atol=1e-3, rtol=1e-3)

    # --- Check 3: bf16 weights/activations -> bf16 compute path (f32 accumulation).
    x_c = x.astype(jnp.bfloat16)
    out_c = jax.block_until_ready(
        positionwise_ffn(x_c, w1.astype(jnp.bfloat16), b1,
                         w2.astype(jnp.bfloat16), b2)
    )
    assert out_c.shape == (batch, seq, d_model) and out_c.dtype == jnp.bfloat16
    assert jnp.allclose(out_c.astype(jnp.float32), ref, atol=5e-2, rtol=5e-2)

    print("KERNEL_OK")
</pallas_src>

<mosaic_0001>
module attributes {stable_mosaic.version = 11 : i64} {
  func.func @ffn_full_kernel(%arg0: i32, %arg1: memref<16x32xf32, #tpu.memory_space<vmem>>, %arg2: memref<32x64xf32, #tpu.memory_space<vmem>>, %arg3: memref<1x64xf32, #tpu.memory_space<vmem>>, %arg4: memref<64x32xf32, #tpu.memory_space<vmem>>, %arg5: memref<1x32xf32, #tpu.memory_space<vmem>>, %arg6: memref<16x32xf32, #tpu.memory_space<vmem>>) attributes {dimension_semantics = [#tpu.dimension_semantics<parallel>], iteration_bounds = array<i64: 1>, scalar_prefetch = 0 : i64, scratch_operands = 0 : i64, tpu.core_type = #tpu.core_type<tc>, window_params = [{transform_indices = @transform_0, window_bounds = array<i64: 16, 32>}, {pipeline_mode = #tpu.pipeline_mode<synchronous>, transform_indices = @transform_1, window_bounds = array<i64: 32, 64>}, {pipeline_mode = #tpu.pipeline_mode<synchronous>, transform_indices = @transform_2, window_bounds = array<i64: 1, 64>}, {pipeline_mode = #tpu.pipeline_mode<synchronous>, transform_indices = @transform_3, window_bounds = array<i64: 64, 32>}, {pipeline_mode = #tpu.pipeline_mode<synchronous>, transform_indices = @transform_4, window_bounds = array<i64: 1, 32>}, {transform_indices = @transform_5, window_bounds = array<i64: 16, 32>}]} {
    %c0 = arith.constant 0 : index
    %c0_0 = arith.constant 0 : index
    %0 = vector.load %arg1[%c0, %c0_0] : memref<16x32xf32, #tpu.memory_space<vmem>>, vector<16x32xf32>
    %c0_1 = arith.constant 0 : index
    %c0_2 = arith.constant 0 : index
    %1 = vector.load %arg2[%c0_1, %c0_2] : memref<32x64xf32, #tpu.memory_space<vmem>>, vector<32x64xf32>
    %cst = arith.constant dense<0.000000e+00> : vector<16x64xf32>
    %2 = tpu.matmul %0, %1, %cst {dimension_numbers = #tpu.dot_dimension_numbers<[1], [0], [0], [1], [0, 0, 1, 1], [], []>} : vector<16x32xf32>, vector<32x64xf32>, vector<16x64xf32> -> vector<16x64xf32>
    %c0_3 = arith.constant 0 : index
    %c0_4 = arith.constant 0 : index
    %3 = vector.load %arg3[%c0_3, %c0_4] : memref<1x64xf32, #tpu.memory_space<vmem>>, vector<1x64xf32>
    %4 = vector.broadcast %3 : vector<1x64xf32> to vector<16x64xf32>
    %5 = arith.addf %2, %4 : vector<16x64xf32>
    %cst_5 = arith.constant 0.000000e+00 : f32
    %6 = vector.broadcast %cst_5 : f32 to vector<16x64xf32>
    %7 = arith.maximumf %5, %6 : vector<16x64xf32>
    %c0_6 = arith.constant 0 : index
    %c0_7 = arith.constant 0 : index
    %8 = vector.load %arg4[%c0_6, %c0_7] : memref<64x32xf32, #tpu.memory_space<vmem>>, vector<64x32xf32>
    %cst_8 = arith.constant dense<0.000000e+00> : vector<16x32xf32>
    %9 = tpu.matmul %7, %8, %cst_8 {dimension_numbers = #tpu.dot_dimension_numbers<[1], [0], [0], [1], [0, 0, 1, 1], [], []>} : vector<16x64xf32>, vector<64x32xf32>, vector<16x32xf32> -> vector<16x32xf32>
    %c0_9 = arith.constant 0 : index
    %c0_10 = arith.constant 0 : index
    %10 = vector.load %arg5[%c0_9, %c0_10] : memref<1x32xf32, #tpu.memory_space<vmem>>, vector<1x32xf32>
    %11 = vector.broadcast %10 : vector<1x32xf32> to vector<16x32xf32>
    %12 = arith.addf %9, %11 : vector<16x32xf32>
    %c0_11 = arith.constant 0 : index
    %c0_12 = arith.constant 0 : index
    %13 = vector.load %arg6[%c0_11, %c0_12] : memref<16x32xf32, #tpu.memory_space<vmem>>, vector<16x32xf32>
    tpu.vector_store %arg6[%c0_11, %c0_12], %12 {strides = array<i32>} : memref<16x32xf32, #tpu.memory_space<vmem>>, vector<16x32xf32>,
    return
  }
  func.func @transform_0(%arg0: i32) -> (i32, i32) {
    %c0_i32 = arith.constant 0 : i32
    %c0_i32_0 = arith.constant 0 : i32
    return %arg0, %c0_i32 : i32, i32
  }
  func.func @transform_1(%arg0: i32) -> (i32, i32) {
    %c0_i32 = arith.constant 0 : i32
    %c0_i32_0 = arith.constant 0 : i32
    %c0_i32_1 = arith.constant 0 : i32
    return %c0_i32, %c0_i32_0 : i32, i32
  }
  func.func @transform_2(%arg0: i32) -> (i32, i32) {
    %c0_i32 = arith.constant 0 : i32
    %c0_i32_0 = arith.constant 0 : i32
    %c0_i32_1 = arith.constant 0 : i32
    return %c0_i32, %c0_i32_0 : i32, i32
  }
  func.func @transform_3(%arg0: i32) -> (i32, i32) {
    %c0_i32 = arith.constant 0 : i32
    %c0_i32_0 = arith.constant 0 : i32
    %c0_i32_1 = arith.constant 0 : i32
    return %c0_i32, %c0_i32_0 : i32, i32
  }
  func.func @transform_4(%arg0: i32) -> (i32, i32) {
    %c0_i32 = arith.constant 0 : i32
    %c0_i32_0 = arith.constant 0 : i32
    %c0_i32_1 = arith.constant 0 : i32
    return %c0_i32, %c0_i32_0 : i32, i32
  }
  func.func @transform_5(%arg0: i32) -> (i32, i32) {
    %c0_i32 = arith.constant 0 : i32
    %c0_i32_0 = arith.constant 0 : i32
    return %arg0, %c0_i32 : i32, i32
  }
}

</mosaic_0001>

<llo_original>
// kernel: tpu_custom_call.1
$region0: #{tpu_custom_call.1}
  #allocation0 [shape = 'u32[]', space=smem, size = 0x4, offset = 0x4, fixed_abs, tag = 'smem constant byte address 0x4 - core index']
  #allocation1 [shape = 'u32[144,128]{1,0:T(1,128)}', space=vmem, size = 0x12000, scoped, tag = 'internal scratch']
  %s0 = inlined_call_operand.vmem [shape: f32[16,32], index: 0, kind: input, shape index: {}]
  %s1 = inlined_call_operand.vmem [shape: f32[32,64], index: 1, kind: input, shape index: {}]
  %s2 = inlined_call_operand.vmem [shape: f32[1,64], index: 2, kind: input, shape index: {}]
  %s3 = inlined_call_operand.vmem [shape: f32[64,32], index: 3, kind: input, shape index: {}]
  %s4 = inlined_call_operand.vmem [shape: f32[1,32], index: 4, kind: input, shape index: {}]
  %s5 = inlined_call_operand.hbm [shape: f32[16,32], index: 5, kind: output, shape index: {}]
  %s6 = sld [smem:[#allocation0]]
  $region30: #{tpu_custom_call.1} parent=0
    _
  %s8 = ssub.s32 1, %s6
  %s9 = scalar_select 0, %s8, %s6
  $region1: #{tpu_custom_call.1} parent=0
    #allocation2 [shape = 'u8[8192]{0}', space=vmem, size = 0x2000, scoped, tag = 'output window, operand 0, single buffered']
    #allocation3 [shape = 's32[1]{0}', space=sflag, size = 0x4, scoped, tag = 'scoped memory for tpu_custom_call.1']
    %10 = vsyncpa [#allocation3], 0
    // Predicated region
    $region2: #{tpu_custom_call.1} parent=1 // pred_check
      _
    $region3: #{tpu_custom_call.1} parent=1 // pred_check_branch
      %12 = sbr.rel (0) target = $region5
    $region4: #{tpu_custom_call.1} parent=1 // pred_region
      _
    $region5: #{tpu_custom_call.1} parent=1 // pred_fallthru
      _
    // Predicated region
    $region6: #{tpu_custom_call.1} parent=1 // pred_check
      _
    $region7: #{tpu_custom_call.1} parent=1 // pred_check_branch
      %14 = sbr.rel (0) target = $region9
    $region8: #{tpu_custom_call.1} parent=1 // pred_region
      _
    $region9: #{tpu_custom_call.1} parent=1 // pred_fallthru
      _
    // Predicated region
    $region10: #{tpu_custom_call.1} parent=1 // pred_check
      _
    $region11: #{tpu_custom_call.1} parent=1 // pred_check_branch
      %16 = sbr.rel (0) target = $region13
    $region12: #{tpu_custom_call.1} parent=1 // pred_region
      _
    $region13: #{tpu_custom_call.1} parent=1 // pred_fallthru
      _
    // Predicated region
    $region14: #{tpu_custom_call.1} parent=1 // pred_check
      _
    $region15: #{tpu_custom_call.1} parent=1 // pred_check_branch
      %18 = sbr.rel (0) target = $region17
    $region16: #{tpu_custom_call.1} parent=1 // pred_region
      _
    $region17: #{tpu_custom_call.1} parent=1 // pred_fallthru
      _
    // Predicated region
    $region18: #{tpu_custom_call.1} parent=1 // pred_check
      _
    $region19: #{tpu_custom_call.1} parent=1 // pred_check_branch
      %20 = sbr.rel (0) target = $region21
    $region20: #{tpu_custom_call.1} parent=1 // pred_region
      _
    $region21: #{tpu_custom_call.1} parent=1 // pred_fallthru
      _
    %v21 = vld [vmem:[%s0] sm:$0xff]
    %v22 = vld [vmem:[%s0 + $0x8] sm:$0xff]
    %v23 = vld [vmem:[%s1] sm:$0xff]
    %v24 = vld [vmem:[%s1 + $0x8] sm:$0xff]
    %v25 = vld [vmem:[%s1 + $0x10] sm:$0xff]
    %v26 = vld [vmem:[%s1 + $0x18] sm:$0xff]
    %v27 = vld [vmem:[%s2] sm:$0x1]
    %v29 = vlaneseq
    %v30 = vshrl.u32 %v29, 7
    %v31 = vsub.s32 0, %v30
    %v32 = vrot.slane %v27, %v31
    %vm34 = vcmask 261120
    %v36 = vsel %vm34, %v21, 0
    %v39 = vsel %vm34, %v22, 0
    %41 = vmatprep.subr.mxu0 0.0
    %42 = vmatpush1.msra.mxu0 0.0
    %43 = vmatprep.subr.mxu0 0.0
    %44 = vmatpush1.msra.mxu0 0.0
    %45 = vmatprep.subr.mxu0 0.0
    %46 = vmatpush1.msra.mxu0 0.0
    %47 = vmatprep.subr.mxu0 0.0
    %48 = vmatpush1.msra.mxu0 0.0
    %49 = vmatprep.subr.mxu0 0.0
    %50 = vmatpush1.msra.mxu0 0.0
    %51 = vmatprep.subr.mxu0 0.0
    %52 = vmatpush1.msra.mxu0 0.0
    %53 = vmatprep.subr.mxu0 0.0
    %54 = vmatpush1.msra.mxu0 0.0
    %55 = vmatprep.subr.mxu0 0.0
    %56 = vmatpush1.msra.mxu0 0.0
    %57 = vmatprep.subr.mxu0 0.0
    %58 = vmatpush1.msra.mxu0 0.0
    %59 = vmatprep.subr.mxu0 0.0
    %60 = vmatpush1.msra.mxu0 0.0
    %61 = vmatprep.subr.mxu0 0.0
    %62 = vmatpush1.msra.mxu0 0.0
    %63 = vmatprep.subr.mxu0 0.0
    %64 = vmatpush1.msra.mxu0 0.0
    %65 = vmatprep.subr.mxu0 0.0
    %66 = vmatpush1.msra.mxu0 %v26
    %67 = vmatprep.subr.mxu0 0.0
    %68 = vmatpush1.msra.mxu0 %v25
    %69 = vmatprep.subr.mxu0 0.0
    %70 = vmatpush1.msra.mxu0 %v24
    %71 = vmatprep.subr.mxu0 0.0
    %72 = vmatpush1.msra.mxu0 %v23
    %73 = vmatprep.subr.mxu0 0.0
    %74 = vmatpush2.msra.mxu0 0.0
    %75 = vmatprep.subr.mxu0 0.0
    %76 = vmatpush2.msra.mxu0 0.0
    %77 = vmatprep.subr.mxu0 0.0
    %78 = vmatpush2.msra.mxu0 0.0
    %79 = vmatprep.subr.mxu0 0.0
    %80 = vmatpush2.msra.mxu0 0.0
    %81 = vmatprep.subr.mxu0 0.0
    %82 = vmatpush2.msra.mxu0 0.0
    %83 = vmatprep.subr.mxu0 0.0
    %84 = vmatpush2.msra.mxu0 0.0
    %85 = vmatprep.subr.mxu0 0.0
    %86 = vmatpush2.msra.mxu0 0.0
    %87 = vmatprep.subr.mxu0 0.0
    %88 = vmatpush2.msra.mxu0 0.0
    %89 = vmatprep.subr.mxu0 0.0
    %90 = vmatpush2.msra.mxu0 0.0
    %91 = vmatprep.subr.mxu0 0.0
    %92 = vmatpush2.msra.mxu0 0.0
    %93 = vmatprep.subr.mxu0 0.0
    %94 = vmatpush2.msra.mxu0 0.0
    %95 = vmatprep.subr.mxu0 0.0
    %96 = vmatpush2.msra.mxu0 0.0
    %97 = vmatprep.subr.mxu0 0.0
    %98 = vmatpush2.msra.mxu0 0.0
    %99 = vmatprep.subr.mxu0 0.0
    %100 = vmatpush2.msra.mxu0 0.0
    %101 = vmatprep.subr.mxu0 0.0
    %102 = vmatpush2.msra.mxu0 0.0
    %103 = vmatprep.subr.mxu0 0.0
    %104 = vmatpush2.msra.mxu0 0.0
    %105 = vmatprep.mubr.f32.mxu0 0.0
    %106 = vmatmul.mubr.f32.gmra.mxu0 %v36
    %v107 = vpop.f32.mrf.mxu0
    %v108 = vadd.f32 %v32, %v107
    %v109 = vpop.f32.mrf.mxu0
    %110 = vmatprep.mubr.f32.mxu0 0.0
    %111 = vmatmul.mubr.f32.gmra.mxu0 %v39
    %v112 = vpop.f32.mrf.mxu0
    %v113 = vadd.f32 %v32, %v112
    %v114 = vpop.f32.mrf.mxu0
    %115 = vdwg.mxu0
    %v116 = vmax.f32 %v108, 0.0
    %v117 = vmax.f32 %v113, 0.0
    %v118 = vld [vmem:[%s3] sm:$0xff]
    %v119 = vld [vmem:[%s3 + $0x8] sm:$0xff]
    %v120 = vld [vmem:[%s3 + $0x10] sm:$0xff]
    %v121 = vld [vmem:[%s3 + $0x18] sm:$0xff]
    %v122 = vld [vmem:[%s3 + $0x20] sm:$0xff]
    %v123 = vld [vmem:[%s3 + $0x28] sm:$0xff]
    %v124 = vld [vmem:[%s3 + $0x30] sm:$0xff]
    %v125 = vld [vmem:[%s3 + $0x38] sm:$0xff]
    %v126 = vld [vmem:[%s4] sm:$0x1]
    %v128 = vlaneseq
    %v129 = vshrl.u32 %v128, 7
    %v130 = vsub.s32 0, %v129
    %v131 = vrot.slane %v126, %v130
    %vm133 = vcmask 523264
    %v135 = vsel %vm133, %v116, 0
    %v138 = vsel %vm133, %v117, 0
    %140 = vmatprep.subr.mxu0 0.0
    %141 = vmatpush1.msra.mxu0 0.0
    %142 = vmatprep.subr.mxu0 0.0
    %143 = vmatpush1.msra.mxu0 0.0
    %144 = vmatprep.subr.mxu0 0.0
    %145 = vmatpush1.msra.mxu0 0.0
    %146 = vmatprep.subr.mxu0 0.0
    %147 = vmatpush1.msra.mxu0 0.0
    %148 = vmatprep.subr.mxu0 0.0
    %149 = vmatpush1.msra.mxu0 0.0
    %150 = vmatprep.subr.mxu0 0.0
    %151 = vmatpush1.msra.mxu0 0.0
    %152 = vmatprep.subr.mxu0 0.0
    %153 = vmatpush1.msra.mxu0 0.0
    %154 = vmatprep.subr.mxu0 0.0
    %155 = vmatpush1.msra.mxu0 0.0
    %156 = vmatprep.subr.mxu0 0.0
    %157 = vmatpush1.msra.mxu0 %v125
    %158 = vmatprep.subr.mxu0 0.0
    %159 = vmatpush1.msra.mxu0 %v124
    %160 = vmatprep.subr.mxu0 0.0
    %161 = vmatpush1.msra.mxu0 %v123
    %162 = vmatprep.subr.mxu0 0.0
    %163 = vmatpush1.msra.mxu0 %v122
    %164 = vmatprep.subr.mxu0 0.0
    %165 = vmatpush1.msra.mxu0 %v121
    %166 = vmatprep.subr.mxu0 0.0
    %167 = vmatpush1.msra.mxu0 %v120
    %168 = vmatprep.subr.mxu0 0.0
    %169 = vmatpush1.msra.mxu0 %v119
    %170 = vmatprep.subr.mxu0 0.0
    %171 = vmatpush1.msra.mxu0 %v118
    %172 = vmatprep.subr.mxu0 0.0
    %173 = vmatpush2.msra.mxu0 0.0
    %174 = vmatprep.subr.mxu0 0.0
    %175 = vmatpush2.msra.mxu0 0.0
    %176 = vmatprep.subr.mxu0 0.0
    %177 = vmatpush2.msra.mxu0 0.0
    %178 = vmatprep.subr.mxu0 0.0
    %179 = vmatpush2.msra.mxu0 0.0
    %180 = vmatprep.subr.mxu0 0.0
    %181 = vmatpush2.msra.mxu0 0.0
    %182 = vmatprep.subr.mxu0 0.0
    %183 = vmatpush2.msra.mxu0 0.0
    %184 = vmatprep.subr.mxu0 0.0
    %185 = vmatpush2.msra.mxu0 0.0
    %186 = vmatprep.subr.mxu0 0.0
    %187 = vmatpush2.msra.mxu0 0.0
    %188 = vmatprep.subr.mxu0 0.0
    %189 = vmatpush2.msra.mxu0 0.0
    %190 = vmatprep.subr.mxu0 0.0
    %191 = vmatpush2.msra.mxu0 0.0
    %192 = vmatprep.subr.mxu0 0.0
    %193 = vmatpush2.msra.mxu0 0.0
    %194 = vmatprep.subr.mxu0 0.0
    %195 = vmatpush2.msra.mxu0 0.0
    %196 = vmatprep.subr.mxu0 0.0
    %197 = vmatpush2.msra.mxu0 0.0
    %198 = vmatprep.subr.mxu0 0.0
    %199 = vmatpush2.msra.mxu0 0.0
    %200 = vmatprep.subr.mxu0 0.0
    %201 = vmatpush2.msra.mxu0 0.0
    %202 = vmatprep.subr.mxu0 0.0
    %203 = vmatpush2.msra.mxu0 0.0
    %204 = vmatprep.mubr.f32.mxu0 0.0
    %205 = vmatmul.mubr.f32.gmra.mxu0 %v135
    %v206 = vpop.f32.mrf.mxu0
    %v207 = vadd.f32 %v131, %v206
    %v208 = vpop.f32.mrf.mxu0
    %209 = vmatprep.mubr.f32.mxu0 0.0
    %210 = vmatmul.mubr.f32.gmra.mxu0 %v138
    %v211 = vpop.f32.mrf.mxu0
    %v212 = vadd.f32 %v131, %v211
    %v213 = vpop.f32.mrf.mxu0
    %214 = vdwg.mxu0
    %215 = vst.msk [vmem:[#allocation2] sm:$0xff] %vm34, %v207
    %216 = vst.msk [vmem:[#allocation2 + $0x8] sm:$0xff] %vm34, %v212
    // Predicated region
    $region22: #{tpu_custom_call.1} parent=1 // pred_check
      _
    $region23: #{tpu_custom_call.1} parent=1 // pred_check_branch
      %218 = sbr.rel (0) target = $region25
    $region24: #{tpu_custom_call.1} parent=1 // pred_region
      %s220 = ssub.s32 256, 256
      %221 = vsyncadd [#allocation3], %s220
      %s222 = sshll.u32 [#allocation2], 4
      %s223 = int_to_ptr.vmem [resolvable:$true] %s222
      %228 = dma.vmem_to_hbm [thread:$0]  %s223, 256, %s5, [#allocation3], 128, 128, 8
    $region25: #{tpu_custom_call.1} parent=1 // pred_fallthru
      _
    // Predicated region
    $region26: #{tpu_custom_call.1} parent=1 // pred_check
      _
    $region27: #{tpu_custom_call.1} parent=1 // pred_check_branch
      %230 = sbr.rel (0) target = $region29
    $region28: #{tpu_custom_call.1} parent=1 // pred_region
      %231 = dma.done [#allocation3], 256
    $region29: #{tpu_custom_call.1} parent=1 // pred_fallthru
      _
    %232 = vsyncpa [#allocation3], 1

</llo_original>
